<compile_context>
chip_gen: v7x
topology: tpu7x:2x2x1
jax: 0.10.0
libtpu: 0.0.40
codegen_flags: <defaults>
</compile_context>

<pallas_src>
import functools

import jax
import jax.numpy as jnp
from jax.experimental import pallas as pl
from jax.experimental.pallas import tpu as pltpu


def _round_up(x, m):
    return ((x + m - 1) // m) * m


def _pad_gate_cols(a, h, hp):
    """(..., 3H) -> (..., 3*Hp): gate g moved to lane-aligned block [g*Hp, g*Hp+H)."""
    pads = [(0, 0)] * (a.ndim - 1)
    parts = []
    for g in range(3):
        blk = a[..., g * h:(g + 1) * h]
        parts.append(jnp.pad(blk, pads + [(0, hp - h)]))
    return jnp.concatenate(parts, axis=-1)


def gru_kernel(xproj_ref, wh_ref, bhn_ref, out_ref, hid_ref, h_scratch,
               *, s_real, mask_tail, matmul_dtype):
    """One time-chunk of the GRU recurrence for one batch block.

    xproj_ref: (Ts, Bblk, 3*Hp)  precomputed x @ W_i + b_fold (gate order r|z|n,
                                 each gate lane-aligned to Hp)
    wh_ref   : (Hp, 3*Hp)        gate-padded hidden-to-hidden weights
    bhn_ref  : (1, Hp)           hidden bias of the n gate only
    out_ref  : (Ts, Bblk, Hp)    this chunk's outputs (lane-dense)
    hid_ref  : (Bblk, Hp)        final hidden state, written on the last chunk
    h_scratch: (Bblk, Hp) f32    hidden state carried across time chunks
    """
    chunk = pl.program_id(1)
    n_chunks = pl.num_programs(1)
    ts, bblk, _ = xproj_ref.shape
    hp = wh_ref.shape[0]

    @pl.when(chunk == 0)
    def _():
        h_scratch[...] = jnp.zeros_like(h_scratch)

    # Loop-invariant operands hoisted out of the (bounded) unrolled time loop.
    wh = wh_ref[...].astype(matmul_dtype)                 # (Hp, 3Hp)
    bhn = jnp.broadcast_to(bhn_ref[...], (bblk, hp))      # (Bblk, Hp)

    def step(t, h_prev):
        gx = xproj_ref[t]                                 # (Bblk, 3Hp)
        gh = jnp.dot(h_prev.astype(matmul_dtype), wh,
                     preferred_element_type=jnp.float32)  # (Bblk, 3Hp), f32 acc
        # Gate slices are lane-aligned (Hp is a multiple of 128) -> free views.
        r = jax.nn.sigmoid(gx[:, 0:hp] + gh[:, 0:hp])
        z = jax.nn.sigmoid(gx[:, hp:2 * hp] + gh[:, hp:2 * hp])
        n = jnp.tanh(gx[:, 2 * hp:3 * hp] + r * (gh[:, 2 * hp:3 * hp] + bhn))
        h_new = (1.0 - z) * n + z * h_prev
        if mask_tail:
            # Padded tail timesteps must not advance the hidden state.
            h_new = jnp.where(chunk * ts + t < s_real, h_new, h_prev)
        out_ref[t] = h_new.astype(out_ref.dtype)          # lane-dense store
        return h_new

    h_final = jax.lax.fori_loop(0, ts, step, h_scratch[...], unroll=True)
    h_scratch[...] = h_final

    @pl.when(chunk == n_chunks - 1)
    def _():
        hid_ref[...] = h_final.astype(hid_ref.dtype)


def encoder_forward(ids, params, *, time_tile=8, matmul_dtype=jnp.bfloat16):
    """ids: (S, B) int32.  Returns (output (S, B, H), hidden (1, B, H))."""
    emb_table = params["embedding"]          # (V, E)
    w_i = params["w_i"]                      # (E, 3H)   gate-fused [r|z|n]
    w_h = params["w_h"]                      # (H, 3H)
    b_i = params["b_i"]                      # (3H,)
    b_h = params["b_h"]                      # (3H,)

    S, B = ids.shape
    E = emb_table.shape[1]
    H = w_h.shape[0]

    # ---- padded / lane-aligned layout -------------------------------------
    Hp = _round_up(H, 128)                   # lane-aligned per-gate slab
    Bp = _round_up(B, 8)                     # sublane multiple
    if Bp > 8:                               # v7x: split batch across the 2 TCs
        n_b = 2
        Bp = _round_up(B, 16)
    else:
        n_b = 1
    Bblk = Bp // n_b

    Ts = max(1, min(time_tile, S))
    # Bound per-invocation VMEM (double-buffered x_proj + out chunks).
    while Ts > 1 and 2 * Ts * Bblk * (3 * Hp + Hp) * 4 > 8 * 2 ** 20:
        Ts = max(1, Ts // 2)
    Sp = _round_up(S, Ts)
    n_chunks = Sp // Ts

    # ---- gate-padded, bias-folded parameters ------------------------------
    # Fold b_hr, b_hz into the input bias (linear in the r/z pre-activations);
    # keep only b_hn in the kernel (it must stay inside r * (gh_n + b_hn)).
    b_fold = b_i + jnp.concatenate([b_h[:2 * H], jnp.zeros((H,), b_h.dtype)])
    w_i_p = _pad_gate_cols(w_i, H, Hp)                             # (E, 3Hp)
    b_fold_p = _pad_gate_cols(b_fold, H, Hp)                       # (3Hp,)
    w_h_p = jnp.pad(_pad_gate_cols(w_h, H, Hp), ((0, Hp - H), (0, 0)))  # (Hp,3Hp)
    b_hn_p = jnp.pad(b_h[2 * H:], (0, Hp - H)).reshape(1, Hp)      # (1, Hp)

    # ---- hoisted, parallel input projection (all timesteps, one GEMM) -----
    embedded = jnp.take(emb_table, ids, axis=0)                    # (S, B, E)
    x_proj = (embedded.reshape(S * B, E) @ w_i_p
              + b_fold_p).reshape(S, B, 3 * Hp)
    x_proj_p = jnp.pad(x_proj, ((0, Sp - S), (0, Bp - B), (0, 0)))

    # ---- VMEM budget / cost hints ------------------------------------------
    vmem_need = (2 * Ts * Bblk * 3 * Hp * 4      # x_proj chunk, double-buffered
                 + 2 * Ts * Bblk * Hp * 4        # out chunk, double-buffered
                 + Hp * 3 * Hp * 4               # W_h resident
                 + 2 * Bblk * Hp * 4             # hidden out + h scratch
                 + 2 * Hp * 4)                   # b_hn
    vmem_limit = int(min(max(4 * vmem_need, 16 * 2 ** 20), 32 * 2 ** 20))

    flops = 2 * Sp * Bp * Hp * 3 * Hp + 12 * Sp * Bp * Hp
    transcendentals = 3 * Sp * Bp * Hp
    bytes_accessed = 4 * (Sp * Bp * 3 * Hp + Sp * Bp * Hp
                          + Hp * 3 * Hp + Bp * Hp + Hp)

    kernel = functools.partial(gru_kernel,
                               s_real=S,
                               mask_tail=(Sp != S),
                               matmul_dtype=matmul_dtype)

    out_pad, hid_pad = pl.pallas_call(
        kernel,
        out_shape=(jax.ShapeDtypeStruct((Sp, Bp, Hp), jnp.float32),
                   jax.ShapeDtypeStruct((Bp, Hp), jnp.float32)),
        grid_spec=pltpu.PrefetchScalarGridSpec(
            num_scalar_prefetch=0,
            grid=(n_b, n_chunks),                      # (batch blocks, time chunks)
            in_specs=[
                pl.BlockSpec((Ts, Bblk, 3 * Hp), lambda ib, ic: (ic, ib, 0)),
                pl.BlockSpec((Hp, 3 * Hp), lambda ib, ic: (0, 0)),
                pl.BlockSpec((1, Hp), lambda ib, ic: (0, 0)),
            ],
            out_specs=[
                pl.BlockSpec((Ts, Bblk, Hp), lambda ib, ic: (ic, ib, 0)),
                pl.BlockSpec((Bblk, Hp), lambda ib, ic: (ib, 0)),
            ],
            scratch_shapes=[pltpu.VMEM((Bblk, Hp), jnp.float32)],
        ),
        compiler_params=pltpu.CompilerParams(
            dimension_semantics=("parallel", "arbitrary"),
            vmem_limit_bytes=vmem_limit),
        cost_estimate=pl.CostEstimate(flops=flops,
                                      transcendentals=transcendentals,
                                      bytes_accessed=bytes_accessed),
    )(x_proj_p, w_h_p, b_hn_p)

    output = out_pad[:S, :B, :H]
    hidden = hid_pad[:B, :H][None]           # (1, B, H) == (layers*dirs, B, H)
    return output, hidden


def init_params(key, vocab_size, embedding_size, hidden_size):
    """Deterministic synthetic init mimicking PyTorch's shapes/init scheme.

    GRU weights are stored gate-fused and pre-transposed for right-mult:
      w_i: (E, 3H), w_h: (H, 3H), b_i/b_h: (3H,), gate order [r, z, n].
    """
    k_emb, k_wi, k_wh, k_bi, k_bh = jax.random.split(key, 5)
    bound = 1.0 / jnp.sqrt(hidden_size)
    H3 = 3 * hidden_size
    return {
        "embedding": jax.random.normal(k_emb, (vocab_size, embedding_size),
                                       jnp.float32),
        "w_i": jax.random.uniform(k_wi, (embedding_size, H3),
                                  jnp.float32, -bound, bound),
        "w_h": jax.random.uniform(k_wh, (hidden_size, H3),
                                  jnp.float32, -bound, bound),
        "b_i": jax.random.uniform(k_bi, (H3,), jnp.float32, -bound, bound),
        "b_h": jax.random.uniform(k_bh, (H3,), jnp.float32, -bound, bound),
    }


def encoder_reference(ids, params):
    """Plain-JAX reference (lax.scan GRU, f32) for correctness checking."""
    emb = jnp.take(params["embedding"], ids, axis=0)      # (S, B, E)
    w_i, w_h, b_i, b_h = (params["w_i"], params["w_h"],
                          params["b_i"], params["b_h"])
    B = ids.shape[1]
    H = w_h.shape[0]

    def step(h, x_t):
        gx = x_t @ w_i + b_i          # (B, 3H)
        gh = h @ w_h + b_h            # (B, 3H)
        r = jax.nn.sigmoid(gx[:, 0:H] + gh[:, 0:H])
        z = jax.nn.sigmoid(gx[:, H:2 * H] + gh[:, H:2 * H])
        n = jnp.tanh(gx[:, 2 * H:3 * H] + r * gh[:, 2 * H:3 * H])
        h_new = (1.0 - z) * n + z * h
        return h_new, h_new

    h0 = jnp.zeros((B, H), jnp.float32)
    h_last, out = jax.lax.scan(step, h0, emb)
    return out, h_last[None]


if __name__ == "__main__":
    # Small shapes consistent with the module's forward.
    VOCAB = 16          # input_size
    EMBED = 32          # embedding_size
    HIDDEN = 32         # hidden_size
    SEQ = 8
    BATCH = 4

    key = jax.random.PRNGKey(0)
    k_param, k_ids = jax.random.split(key)
    params = init_params(k_param, VOCAB, EMBED, HIDDEN)
    ids = jax.random.randint(k_ids, (SEQ, BATCH), 0, VOCAB, dtype=jnp.int32)

    ref_out, ref_hid = encoder_reference(ids, params)

    # Exact f32 recurrence-matmul path (multi-chunk carry: time_tile=4 -> 2 chunks).
    out32, hid32 = encoder_forward(ids, params, time_tile=4,
                                   matmul_dtype=jnp.float32)
    out32, hid32 = jax.block_until_ready((out32, hid32))
    assert out32.shape == (SEQ, BATCH, HIDDEN)
    assert hid32.shape == (1, BATCH, HIDDEN)
    assert jnp.allclose(out32, ref_out, atol=1e-5, rtol=1e-5)
    assert jnp.allclose(hid32, ref_hid, atol=1e-5, rtol=1e-5)

    # Default bf16 MXU fast path (also exercises time padding/masking: Ts=3).
    out_bf, hid_bf = encoder_forward(ids, params, time_tile=3)
    out_bf, hid_bf = jax.block_until_ready((out_bf, hid_bf))
    assert out_bf.shape == (SEQ, BATCH, HIDDEN)
    assert hid_bf.shape == (1, BATCH, HIDDEN)
    assert jnp.allclose(out_bf, ref_out, atol=5e-2, rtol=5e-2)
    assert jnp.allclose(hid_bf, ref_hid, atol=5e-2, rtol=5e-2)

    print("KERNEL_OK")
</pallas_src>

<mosaic_0001>
module attributes {stable_mosaic.version = 11 : i64} {
  func.func @gru_kernel(%arg0: i32, %arg1: i32, %arg2: memref<4x8x384xf32, #tpu.memory_space<vmem>>, %arg3: memref<128x384xf32, #tpu.memory_space<vmem>>, %arg4: memref<1x128xf32, #tpu.memory_space<vmem>>, %arg5: memref<4x8x128xf32, #tpu.memory_space<vmem>>, %arg6: memref<8x128xf32, #tpu.memory_space<vmem>>, %arg7: memref<8x128xf32, #tpu.memory_space<vmem>>) attributes {dimension_semantics = [#tpu.dimension_semantics<parallel>, #tpu.dimension_semantics<arbitrary>], iteration_bounds = array<i64: 1, 2>, scalar_prefetch = 0 : i64, scratch_operands = 1 : i64, tpu.core_type = #tpu.core_type<tc>, window_params = [{transform_indices = @transform_0, window_bounds = array<i64: 4, 8, 384>}, {pipeline_mode = #tpu.pipeline_mode<synchronous>, transform_indices = @transform_1, window_bounds = array<i64: 128, 384>}, {pipeline_mode = #tpu.pipeline_mode<synchronous>, transform_indices = @transform_2, window_bounds = array<i64: 1, 128>}, {transform_indices = @transform_3, window_bounds = array<i64: 4, 8, 128>}, {transform_indices = @transform_4, window_bounds = array<i64: 8, 128>}]} {
    %c0_i32 = arith.constant 0 : i32
    %0 = arith.cmpi eq, %arg1, %c0_i32 : i32
    %1 = arith.extui %0 : i1 to i32
    %c0_i32_0 = arith.constant 0 : i32
    %2 = arith.cmpi ne, %1, %c0_i32_0 : i32
    scf.if %2 {
      %cst_42 = arith.constant 0.000000e+00 : f32
      %152 = vector.broadcast %cst_42 : f32 to vector<8x128xf32>
      %c0_43 = arith.constant 0 : index
      %c0_44 = arith.constant 0 : index
      %153 = vector.load %arg7[%c0_43, %c0_44] : memref<8x128xf32, #tpu.memory_space<vmem>>, vector<8x128xf32>
      tpu.vector_store %arg7[%c0_43, %c0_44], %152 {strides = array<i32>} : memref<8x128xf32, #tpu.memory_space<vmem>>, vector<8x128xf32>,
    } else {
    }
    %c0 = arith.constant 0 : index
    %c0_1 = arith.constant 0 : index
    %3 = vector.load %arg3[%c0, %c0_1] : memref<128x384xf32, #tpu.memory_space<vmem>>, vector<128x384xf32>
    %c0_2 = arith.constant 0 : index
    %c0_3 = arith.constant 0 : index
    %4 = vector.load %arg4[%c0_2, %c0_3] : memref<1x128xf32, #tpu.memory_space<vmem>>, vector<1x128xf32>
    %5 = vector.shape_cast %4 : vector<1x128xf32> to vector<1x128xf32>
    %6 = vector.broadcast %5 : vector<1x128xf32> to vector<8x128xf32>
    %c0_4 = arith.constant 0 : index
    %c0_5 = arith.constant 0 : index
    %7 = vector.load %arg7[%c0_4, %c0_5] : memref<8x128xf32, #tpu.memory_space<vmem>>, vector<8x128xf32>
    %c0_i32_6 = arith.constant 0 : i32
    %8 = arith.index_cast %c0_i32_6 : i32 to index
    %c0_7 = arith.constant 0 : index
    %c0_8 = arith.constant 0 : index
    %9 = vector.load %arg2[%8, %c0_7, %c0_8] : memref<4x8x384xf32, #tpu.memory_space<vmem>>, vector<1x8x384xf32>
    %10 = vector.shape_cast %9 : vector<1x8x384xf32> to vector<8x384xf32>
    %cst = arith.constant dense<0.000000e+00> : vector<8x384xf32>
    %11 = tpu.matmul %7, %3, %cst {dimension_numbers = #tpu.dot_dimension_numbers<[1], [0], [0], [1], [0, 0, 1, 1], [], []>} : vector<8x128xf32>, vector<128x384xf32>, vector<8x384xf32> -> vector<8x384xf32>
    %12 = vector.extract_strided_slice %10 {offsets = [0, 0], sizes = [8, 128], strides = [1, 1]} : vector<8x384xf32> to vector<8x128xf32>
    %13 = vector.extract_strided_slice %11 {offsets = [0, 0], sizes = [8, 128], strides = [1, 1]} : vector<8x384xf32> to vector<8x128xf32>
    %14 = arith.addf %12, %13 : vector<8x128xf32>
    %15 = arith.negf %14 : vector<8x128xf32>
    %16 = math.exp %15 : vector<8x128xf32>
    %cst_9 = arith.constant 1.000000e+00 : f32
    %17 = vector.broadcast %cst_9 : f32 to vector<8x128xf32>
    %18 = arith.addf %17, %16 : vector<8x128xf32>
    %19 = arith.divf %17, %18 : vector<8x128xf32>
    %20 = vector.extract_strided_slice %10 {offsets = [0, 128], sizes = [8, 128], strides = [1, 1]} : vector<8x384xf32> to vector<8x128xf32>
    %21 = vector.extract_strided_slice %11 {offsets = [0, 128], sizes = [8, 128], strides = [1, 1]} : vector<8x384xf32> to vector<8x128xf32>
    %22 = arith.addf %20, %21 : vector<8x128xf32>
    %23 = arith.negf %22 : vector<8x128xf32>
    %24 = math.exp %23 : vector<8x128xf32>
    %cst_10 = arith.constant 1.000000e+00 : f32
    %25 = vector.broadcast %cst_10 : f32 to vector<8x128xf32>
    %26 = arith.addf %25, %24 : vector<8x128xf32>
    %27 = arith.divf %25, %26 : vector<8x128xf32>
    %28 = vector.extract_strided_slice %10 {offsets = [0, 256], sizes = [8, 128], strides = [1, 1]} : vector<8x384xf32> to vector<8x128xf32>
    %29 = vector.extract_strided_slice %11 {offsets = [0, 256], sizes = [8, 128], strides = [1, 1]} : vector<8x384xf32> to vector<8x128xf32>
    %30 = arith.addf %29, %6 : vector<8x128xf32>
    %31 = arith.mulf %19, %30 : vector<8x128xf32>
    %32 = arith.addf %28, %31 : vector<8x128xf32>
    %33 = math.tanh %32 : vector<8x128xf32>
    %cst_11 = arith.constant 1.000000e+00 : f32
    %34 = vector.broadcast %cst_11 : f32 to vector<8x128xf32>
    %35 = arith.subf %34, %27 : vector<8x128xf32>
    %36 = arith.mulf %35, %33 : vector<8x128xf32>
    %37 = arith.mulf %27, %7 : vector<8x128xf32>
    %38 = arith.addf %36, %37 : vector<8x128xf32>
    %39 = arith.index_cast %c0_i32_6 : i32 to index
    %c0_12 = arith.constant 0 : index
    %c0_13 = arith.constant 0 : index
    %40 = vector.load %arg5[%39, %c0_12, %c0_13] : memref<4x8x128xf32, #tpu.memory_space<vmem>>, vector<1x8x128xf32>
    %41 = vector.shape_cast %40 : vector<1x8x128xf32> to vector<8x128xf32>
    %42 = vector.shape_cast %38 : vector<8x128xf32> to vector<1x8x128xf32>
    tpu.vector_store %arg5[%39, %c0_12, %c0_13], %42 {strides = array<i32>} : memref<4x8x128xf32, #tpu.memory_space<vmem>>, vector<1x8x128xf32>,
    %c1_i32 = arith.constant 1 : i32
    %43 = arith.index_cast %c1_i32 : i32 to index
    %c0_14 = arith.constant 0 : index
    %c0_15 = arith.constant 0 : index
    %44 = vector.load %arg2[%43, %c0_14, %c0_15] : memref<4x8x384xf32, #tpu.memory_space<vmem>>, vector<1x8x384xf32>
    %45 = vector.shape_cast %44 : vector<1x8x384xf32> to vector<8x384xf32>
    %cst_16 = arith.constant dense<0.000000e+00> : vector<8x384xf32>
    %46 = tpu.matmul %38, %3, %cst_16 {dimension_numbers = #tpu.dot_dimension_numbers<[1], [0], [0], [1], [0, 0, 1, 1], [], []>} : vector<8x128xf32>, vector<128x384xf32>, vector<8x384xf32> -> vector<8x384xf32>
    %47 = vector.extract_strided_slice %45 {offsets = [0, 0], sizes = [8, 128], strides = [1, 1]} : vector<8x384xf32> to vector<8x128xf32>
    %48 = vector.extract_strided_slice %46 {offsets = [0, 0], sizes = [8, 128], strides = [1, 1]} : vector<8x384xf32> to vector<8x128xf32>
    %49 = arith.addf %47, %48 : vector<8x128xf32>
    %50 = arith.negf %49 : vector<8x128xf32>
    %51 = math.exp %50 : vector<8x128xf32>
    %cst_17 = arith.constant 1.000000e+00 : f32
    %52 = vector.broadcast %cst_17 : f32 to vector<8x128xf32>
    %53 = arith.addf %52, %51 : vector<8x128xf32>
    %54 = arith.divf %52, %53 : vector<8x128xf32>
    %55 = vector.extract_strided_slice %45 {offsets = [0, 128], sizes = [8, 128], strides = [1, 1]} : vector<8x384xf32> to vector<8x128xf32>
    %56 = vector.extract_strided_slice %46 {offsets = [0, 128], sizes = [8, 128], strides = [1, 1]} : vector<8x384xf32> to vector<8x128xf32>
    %57 = arith.addf %55, %56 : vector<8x128xf32>
    %58 = arith.negf %57 : vector<8x128xf32>
    %59 = math.exp %58 : vector<8x128xf32>
    %cst_18 = arith.constant 1.000000e+00 : f32
    %60 = vector.broadcast %cst_18 : f32 to vector<8x128xf32>
    %61 = arith.addf %60, %59 : vector<8x128xf32>
    %62 = arith.divf %60, %61 : vector<8x128xf32>
    %63 = vector.extract_strided_slice %45 {offsets = [0, 256], sizes = [8, 128], strides = [1, 1]} : vector<8x384xf32> to vector<8x128xf32>
    %64 = vector.extract_strided_slice %46 {offsets = [0, 256], sizes = [8, 128], strides = [1, 1]} : vector<8x384xf32> to vector<8x128xf32>
    %65 = arith.addf %64, %6 : vector<8x128xf32>
    %66 = arith.mulf %54, %65 : vector<8x128xf32>
    %67 = arith.addf %63, %66 : vector<8x128xf32>
    %68 = math.tanh %67 : vector<8x128xf32>
    %cst_19 = arith.constant 1.000000e+00 : f32
    %69 = vector.broadcast %cst_19 : f32 to vector<8x128xf32>
    %70 = arith.subf %69, %62 : vector<8x128xf32>
    %71 = arith.mulf %70, %68 : vector<8x128xf32>
    %72 = arith.mulf %62, %38 : vector<8x128xf32>
    %73 = arith.addf %71, %72 : vector<8x128xf32>
    %74 = arith.index_cast %c1_i32 : i32 to index
    %c0_20 = arith.constant 0 : index
    %c0_21 = arith.constant 0 : index
    %75 = vector.load %arg5[%74, %c0_20, %c0_21] : memref<4x8x128xf32, #tpu.memory_space<vmem>>, vector<1x8x128xf32>
    %76 = vector.shape_cast %75 : vector<1x8x128xf32> to vector<8x128xf32>
    %77 = vector.shape_cast %73 : vector<8x128xf32> to vector<1x8x128xf32>
    tpu.vector_store %arg5[%74, %c0_20, %c0_21], %77 {strides = array<i32>} : memref<4x8x128xf32, #tpu.memory_space<vmem>>, vector<1x8x128xf32>,
    %c2_i32 = arith.constant 2 : i32
    %78 = arith.index_cast %c2_i32 : i32 to index
    %c0_22 = arith.constant 0 : index
    %c0_23 = arith.constant 0 : index
    %79 = vector.load %arg2[%78, %c0_22, %c0_23] : memref<4x8x384xf32, #tpu.memory_space<vmem>>, vector<1x8x384xf32>
    %80 = vector.shape_cast %79 : vector<1x8x384xf32> to vector<8x384xf32>
    %cst_24 = arith.constant dense<0.000000e+00> : vector<8x384xf32>
    %81 = tpu.matmul %73, %3, %cst_24 {dimension_numbers = #tpu.dot_dimension_numbers<[1], [0], [0], [1], [0, 0, 1, 1], [], []>} : vector<8x128xf32>, vector<128x384xf32>, vector<8x384xf32> -> vector<8x384xf32>
    %82 = vector.extract_strided_slice %80 {offsets = [0, 0], sizes = [8, 128], strides = [1, 1]} : vector<8x384xf32> to vector<8x128xf32>
    %83 = vector.extract_strided_slice %81 {offsets = [0, 0], sizes = [8, 128], strides = [1, 1]} : vector<8x384xf32> to vector<8x128xf32>
    %84 = arith.addf %82, %83 : vector<8x128xf32>
    %85 = arith.negf %84 : vector<8x128xf32>
    %86 = math.exp %85 : vector<8x128xf32>
    %cst_25 = arith.constant 1.000000e+00 : f32
    %87 = vector.broadcast %cst_25 : f32 to vector<8x128xf32>
    %88 = arith.addf %87, %86 : vector<8x128xf32>
    %89 = arith.divf %87, %88 : vector<8x128xf32>
    %90 = vector.extract_strided_slice %80 {offsets = [0, 128], sizes = [8, 128], strides = [1, 1]} : vector<8x384xf32> to vector<8x128xf32>
    %91 = vector.extract_strided_slice %81 {offsets = [0, 128], sizes = [8, 128], strides = [1, 1]} : vector<8x384xf32> to vector<8x128xf32>
    %92 = arith.addf %90, %91 : vector<8x128xf32>
    %93 = arith.negf %92 : vector<8x128xf32>
    %94 = math.exp %93 : vector<8x128xf32>
    %cst_26 = arith.constant 1.000000e+00 : f32
    %95 = vector.broadcast %cst_26 : f32 to vector<8x128xf32>
    %96 = arith.addf %95, %94 : vector<8x128xf32>
    %97 = arith.divf %95, %96 : vector<8x128xf32>
    %98 = vector.extract_strided_slice %80 {offsets = [0, 256], sizes = [8, 128], strides = [1, 1]} : vector<8x384xf32> to vector<8x128xf32>
    %99 = vector.extract_strided_slice %81 {offsets = [0, 256], sizes = [8, 128], strides = [1, 1]} : vector<8x384xf32> to vector<8x128xf32>
    %100 = arith.addf %99, %6 : vector<8x128xf32>
    %101 = arith.mulf %89, %100 : vector<8x128xf32>
    %102 = arith.addf %98, %101 : vector<8x128xf32>
    %103 = math.tanh %102 : vector<8x128xf32>
    %cst_27 = arith.constant 1.000000e+00 : f32
    %104 = vector.broadcast %cst_27 : f32 to vector<8x128xf32>
    %105 = arith.subf %104, %97 : vector<8x128xf32>
    %106 = arith.mulf %105, %103 : vector<8x128xf32>
    %107 = arith.mulf %97, %73 : vector<8x128xf32>
    %108 = arith.addf %106, %107 : vector<8x128xf32>
    %109 = arith.index_cast %c2_i32 : i32 to index
    %c0_28 = arith.constant 0 : index
    %c0_29 = arith.constant 0 : index
    %110 = vector.load %arg5[%109, %c0_28, %c0_29] : memref<4x8x128xf32, #tpu.memory_space<vmem>>, vector<1x8x128xf32>
    %111 = vector.shape_cast %110 : vector<1x8x128xf32> to vector<8x128xf32>
    %112 = vector.shape_cast %108 : vector<8x128xf32> to vector<1x8x128xf32>
    tpu.vector_store %arg5[%109, %c0_28, %c0_29], %112 {strides = array<i32>} : memref<4x8x128xf32, #tpu.memory_space<vmem>>, vector<1x8x128xf32>,
    %c3_i32 = arith.constant 3 : i32
    %113 = arith.index_cast %c3_i32 : i32 to index
    %c0_30 = arith.constant 0 : index
    %c0_31 = arith.constant 0 : index
    %114 = vector.load %arg2[%113, %c0_30, %c0_31] : memref<4x8x384xf32, #tpu.memory_space<vmem>>, vector<1x8x384xf32>
    %115 = vector.shape_cast %114 : vector<1x8x384xf32> to vector<8x384xf32>
    %cst_32 = arith.constant dense<0.000000e+00> : vector<8x384xf32>
    %116 = tpu.matmul %108, %3, %cst_32 {dimension_numbers = #tpu.dot_dimension_numbers<[1], [0], [0], [1], [0, 0, 1, 1], [], []>} : vector<8x128xf32>, vector<128x384xf32>, vector<8x384xf32> -> vector<8x384xf32>
    %117 = vector.extract_strided_slice %115 {offsets = [0, 0], sizes = [8, 128], strides = [1, 1]} : vector<8x384xf32> to vector<8x128xf32>
    %118 = vector.extract_strided_slice %116 {offsets = [0, 0], sizes = [8, 128], strides = [1, 1]} : vector<8x384xf32> to vector<8x128xf32>
    %119 = arith.addf %117, %118 : vector<8x128xf32>
    %120 = arith.negf %119 : vector<8x128xf32>
    %121 = math.exp %120 : vector<8x128xf32>
    %cst_33 = arith.constant 1.000000e+00 : f32
    %122 = vector.broadcast %cst_33 : f32 to vector<8x128xf32>
    %123 = arith.addf %122, %121 : vector<8x128xf32>
    %124 = arith.divf %122, %123 : vector<8x128xf32>
    %125 = vector.extract_strided_slice %115 {offsets = [0, 128], sizes = [8, 128], strides = [1, 1]} : vector<8x384xf32> to vector<8x128xf32>
    %126 = vector.extract_strided_slice %116 {offsets = [0, 128], sizes = [8, 128], strides = [1, 1]} : vector<8x384xf32> to vector<8x128xf32>
    %127 = arith.addf %125, %126 : vector<8x128xf32>
    %128 = arith.negf %127 : vector<8x128xf32>
    %129 = math.exp %128 : vector<8x128xf32>
    %cst_34 = arith.constant 1.000000e+00 : f32
    %130 = vector.broadcast %cst_34 : f32 to vector<8x128xf32>
    %131 = arith.addf %130, %129 : vector<8x128xf32>
    %132 = arith.divf %130, %131 : vector<8x128xf32>
    %133 = vector.extract_strided_slice %115 {offsets = [0, 256], sizes = [8, 128], strides = [1, 1]} : vector<8x384xf32> to vector<8x128xf32>
    %134 = vector.extract_strided_slice %116 {offsets = [0, 256], sizes = [8, 128], strides = [1, 1]} : vector<8x384xf32> to vector<8x128xf32>
    %135 = arith.addf %134, %6 : vector<8x128xf32>
    %136 = arith.mulf %124, %135 : vector<8x128xf32>
    %137 = arith.addf %133, %136 : vector<8x128xf32>
    %138 = math.tanh %137 : vector<8x128xf32>
    %cst_35 = arith.constant 1.000000e+00 : f32
    %139 = vector.broadcast %cst_35 : f32 to vector<8x128xf32>
    %140 = arith.subf %139, %132 : vector<8x128xf32>
    %141 = arith.mulf %140, %138 : vector<8x128xf32>
    %142 = arith.mulf %132, %108 : vector<8x128xf32>
    %143 = arith.addf %141, %142 : vector<8x128xf32>
    %144 = arith.index_cast %c3_i32 : i32 to index
    %c0_36 = arith.constant 0 : index
    %c0_37 = arith.constant 0 : index
    %145 = vector.load %arg5[%144, %c0_36, %c0_37] : memref<4x8x128xf32, #tpu.memory_space<vmem>>, vector<1x8x128xf32>
    %146 = vector.shape_cast %145 : vector<1x8x128xf32> to vector<8x128xf32>
    %147 = vector.shape_cast %143 : vector<8x128xf32> to vector<1x8x128xf32>
    tpu.vector_store %arg5[%144, %c0_36, %c0_37], %147 {strides = array<i32>} : memref<4x8x128xf32, #tpu.memory_space<vmem>>, vector<1x8x128xf32>,
    %c4_i32 = arith.constant 4 : i32
    %c0_38 = arith.constant 0 : index
    %c0_39 = arith.constant 0 : index
    %148 = vector.load %arg7[%c0_38, %c0_39] : memref<8x128xf32, #tpu.memory_space<vmem>>, vector<8x128xf32>
    tpu.vector_store %arg7[%c0_38, %c0_39], %143 {strides = array<i32>} : memref<8x128xf32, #tpu.memory_space<vmem>>, vector<8x128xf32>,
    %c1_i32_40 = arith.constant 1 : i32
    %149 = arith.cmpi eq, %arg1, %c1_i32_40 : i32
    %150 = arith.extui %149 : i1 to i32
    %c0_i32_41 = arith.constant 0 : i32
    %151 = arith.cmpi ne, %150, %c0_i32_41 : i32
    scf.if %151 {
      %c0_42 = arith.constant 0 : index
      %c0_43 = arith.constant 0 : index
      %152 = vector.load %arg6[%c0_42, %c0_43] : memref<8x128xf32, #tpu.memory_space<vmem>>, vector<8x128xf32>
      tpu.vector_store %arg6[%c0_42, %c0_43], %143 {strides = array<i32>} : memref<8x128xf32, #tpu.memory_space<vmem>>, vector<8x128xf32>,
    } else {
    }
    return
  }
  func.func @transform_0(%arg0: i32, %arg1: i32) -> (i32, i32, i32) {
    %c0_i32 = arith.constant 0 : i32
    %c0_i32_0 = arith.constant 0 : i32
    return %arg1, %arg0, %c0_i32 : i32, i32, i32
  }
  func.func @transform_1(%arg0: i32, %arg1: i32) -> (i32, i32) {
    %c0_i32 = arith.constant 0 : i32
    %c0_i32_0 = arith.constant 0 : i32
    %c0_i32_1 = arith.constant 0 : i32
    return %c0_i32, %c0_i32_0 : i32, i32
  }
  func.func @transform_2(%arg0: i32, %arg1: i32) -> (i32, i32) {
    %c0_i32 = arith.constant 0 : i32
    %c0_i32_0 = arith.constant 0 : i32
    %c0_i32_1 = arith.constant 0 : i32
    return %c0_i32, %c0_i32_0 : i32, i32
  }
  func.func @transform_3(%arg0: i32, %arg1: i32) -> (i32, i32, i32) {
    %c0_i32 = arith.constant 0 : i32
    %c0_i32_0 = arith.constant 0 : i32
    return %arg1, %arg0, %c0_i32 : i32, i32, i32
  }
  func.func @transform_4(%arg0: i32, %arg1: i32) -> (i32, i32) {
    %c0_i32 = arith.constant 0 : i32
    %c0_i32_0 = arith.constant 0 : i32
    return %arg0, %c0_i32 : i32, i32
  }
}

</mosaic_0001>

<llo_original>
// kernel: tpu_custom_call.1
$region0: #{tpu_custom_call.1}
  #allocation0 [shape = 'u32[]', space=smem, size = 0x4, offset = 0x4, fixed_abs, tag = 'smem constant byte address 0x4 - core index']
  #allocation1 [shape = 'u32[144,128]{1,0:T(1,128)}', space=vmem, size = 0x12000, scoped, tag = 'internal scratch']
  #allocation2 [shape = 'f32[8,128]{1,0:T(8,128)}', space=vmem, size = 0x1000, scoped, tag = 'scratch operand']
  %s0 = inlined_call_operand.hbm [shape: f32[8,8,384], index: 0, kind: input, shape index: {}]
  %s1 = inlined_call_operand.hbm [shape: f32[128,384], index: 1, kind: input, shape index: {}]
  %s2 = inlined_call_operand.vmem [shape: f32[1,128], index: 2, kind: input, shape index: {}]
  %s3 = inlined_call_operand.hbm [shape: f32[8,8,128], index: 3, kind: output, shape index: {0}]
  %s4 = inlined_call_operand.hbm [shape: f32[8,128], index: 4, kind: output, shape index: {1}]
  %5 = xla_tuple %s3, %s4
  %s6 = sld [smem:[#allocation0]]
  $region69: #{tpu_custom_call.1} parent=0
    _
  %s8 = ssub.s32 1, %s6
  %s9 = scalar_select 0, %s8, %s6
  $region1: #{tpu_custom_call.1} parent=0
    #allocation3 [shape = 'u8[98304]{0}', space=vmem, size = 0x18000, scoped, tag = 'input window, operand 0']
    #allocation4 [shape = 's32[2]{0}', space=sflag, size = 0x8, scoped, tag = 'scoped memory for tpu_custom_call.1']
    #allocation5 [shape = 's32[2]{0}', space=sflag, size = 0x8, scoped, tag = 'scoped memory for tpu_custom_call.1']
    #allocation6 [shape = 'u8[196608]{0}', space=vmem, size = 0x30000, scoped, tag = 'input window, operand 1, single buffered']
    #allocation7 [shape = 's32[1]{0}', space=sflag, size = 0x4, scoped, tag = 'scoped memory for tpu_custom_call.1']
    #allocation8 [shape = 'u8[32768]{0}', space=vmem, size = 0x8000, scoped, tag = 'output window, operand 0']
    #allocation9 [shape = 'u8[4096]{0}', space=vmem, size = 0x1000, scoped, tag = 'output window, operand 1, single buffered']
    #allocation10 [shape = 's32[1]{0}', space=sflag, size = 0x4, scoped, tag = 'scoped memory for tpu_custom_call.1']
    %10 = vsyncpa [#allocation4], 0
    %s11 = scalar_lea.sflag [#allocation4], 1
    %12 = vsyncpa %s11, 0
    %13 = vsyncpa [#allocation7], 0
    %14 = vsyncpa [#allocation5], 0
    %s15 = scalar_lea.sflag [#allocation5], 1
    %16 = vsyncpa %s15, 0
    %17 = vsyncpa [#allocation10], 0
    loop: start=0, step=1, limit=4
    $region2: #{tpu_custom_call.1} parent=1 // loop_pre_header
      _
    $region3: #{tpu_custom_call.1} parent=1 // loop_header
      %s19 = sphi 0, %s23
      %p20 = scmp.ge.s32.totalorder %s19, 4
      %s26 = sphi 0, %s38
      %s27 = sphi 0, %s34
      %s28 = sphi 0, %s26
      %s29 = sphi 0, %s27
      %s30 = sphi 0, %s28
      %s31 = sphi 0, %s29
      %s43 = sphi 0, %s45
      %s46 = sphi 0, %s43
      %s47 = sphi 0, %s46
      %s63 = sphi 0, %s47
      %s67 = sphi 0, %s67
      %s69 = sphi 0, %s67
      %s70 = sphi 0, %s69
      %s84 = sphi 0, %s70
      %s88 = sphi 0, %s88
      %s90 = sphi 0, %s88
      %s91 = sphi 0, %s90
      %s105 = sphi 0, %s91
      %s113 = sphi 0, %s115
      %s116 = sphi 0, %s113
      %s117 = sphi 0, %s116
      %s133 = sphi 0, %s117
      %s139 = sphi 0, %s141
      %s142 = sphi 0, %s139
      %s143 = sphi 0, %s142
      %s159 = sphi 0, %s143
    $region4: #{tpu_custom_call.1} parent=1 // loop_header_branch
      %22 = sbr.rel (%p20) target = $region8
    $region5: #{tpu_custom_call.1} parent=1 // loop_body
      %s24 = ssub.s32 %s19, 1
      %s25 = ssub.s32 %s19, 2
      %s32 = sadd.s32 1, %s27
      %p33 = scmp.ge.s32.totalorder %s32, 2
      %s34 = scalar_select %p33, 0, %s32
      %s35 = sadd.s32 1, %s26
      %s36 = scalar_select %p33, %s35, %s26
      %p37 = scmp.ge.s32.totalorder %s36, 1
      %s38 = scalar_select %p37, 0, %s36
      %s39 = ssub.s32 %s27, %s34
      %s40 = ssub.s32 %s26, %s38
      %s41 = sor.u32 %s39, %s40
      %p42 = scmp.eq.s32.totalorder %s41, 0
      %s44 = sadd.s32 %s43, 1
      %s45 = scalar_select %p42, %s43, %s44
      %p48 = pneg %p42
      %p49 = scmp.eq.s32.totalorder %s19, 1
      %p50 = por %p48, %p49
      %p51 = scmp.ne.s32.totalorder %s43, %s46
      %p52 = scmp.eq.s32.totalorder %s19, 0
      %p53 = por %p51, %p52
      %p54 = scmp.ne.s32.totalorder %s43, %s46
      %p55 = scmp.eq.s32.totalorder %s24, 1
      %p56 = por %p54, %p55
      %p57 = scmp.ne.s32.totalorder %s46, %s47
      %p58 = scmp.eq.s32.totalorder %s24, 0
      %p59 = por %p57, %p58
      %p60 = scmp.ne.s32.totalorder %s46, %s47
      %p61 = scmp.eq.s32.totalorder %s25, 1
      %p62 = por %p60, %p61
      %p64 = scmp.ne.s32.totalorder %s47, %s63
      %p65 = scmp.eq.s32.totalorder %s25, 0
      %p66 = por %p64, %p65
      %s68 = sadd.s32 %s67, 1
      %p71 = scmp.eq.s32.totalorder %s19, 1
      %p72 = scmp.ne.s32.totalorder %s67, %s69
      %p73 = scmp.eq.s32.totalorder %s19, 0
      %p74 = por %p72, %p73
      %p75 = scmp.ne.s32.totalorder %s67, %s69
      %p76 = scmp.eq.s32.totalorder %s24, 1
      %p77 = por %p75, %p76
      %p78 = scmp.ne.s32.totalorder %s69, %s70
      %p79 = scmp.eq.s32.totalorder %s24, 0
      %p80 = por %p78, %p79
      %p81 = scmp.ne.s32.totalorder %s69, %s70
      %p82 = scmp.eq.s32.totalorder %s25, 1
      %p83 = por %p81, %p82
      %p85 = scmp.ne.s32.totalorder %s70, %s84
      %p86 = scmp.eq.s32.totalorder %s25, 0
      %p87 = por %p85, %p86
      %s89 = sadd.s32 %s88, 1
      %p92 = scmp.eq.s32.totalorder %s19, 1
      %p93 = scmp.ne.s32.totalorder %s88, %s90
      %p94 = scmp.eq.s32.totalorder %s19, 0
      %p95 = por %p93, %p94
      %p96 = scmp.ne.s32.totalorder %s88, %s90
      %p97 = scmp.eq.s32.totalorder %s24, 1
      %p98 = por %p96, %p97
      %p99 = scmp.ne.s32.totalorder %s90, %s91
      %p100 = scmp.eq.s32.totalorder %s24, 0
      %p101 = por %p99, %p100
      %p102 = scmp.ne.s32.totalorder %s90, %s91
      %p103 = scmp.eq.s32.totalorder %s25, 1
      %p104 = por %p102, %p103
      %p106 = scmp.ne.s32.totalorder %s91, %s105
      %p107 = scmp.eq.s32.totalorder %s25, 0
      %p108 = por %p106, %p107
      %s109 = ssub.s32 %s27, %s34
      %s110 = ssub.s32 %s26, %s38
      %s111 = sor.u32 %s109, %s110
      %p112 = scmp.eq.s32.totalorder %s111, 0
      %s114 = sadd.s32 %s113, 1
      %s115 = scalar_select %p112, %s113, %s114
      %p118 = pneg %p112
      %p119 = scmp.eq.s32.totalorder %s19, 1
      %p120 = por %p118, %p119
      %p121 = scmp.ne.s32.totalorder %s113, %s116
      %p122 = scmp.eq.s32.totalorder %s19, 0
      %p123 = por %p121, %p122
      %p124 = scmp.ne.s32.totalorder %s113, %s116
      %p125 = scmp.eq.s32.totalorder %s24, 1
      %p126 = por %p124, %p125
      %p127 = scmp.ne.s32.totalorder %s116, %s117
      %p128 = scmp.eq.s32.totalorder %s24, 0
      %p129 = por %p127, %p128
      %p130 = scmp.ne.s32.totalorder %s116, %s117
      %p131 = scmp.eq.s32.totalorder %s25, 1
      %p132 = por %p130, %p131
      %p134 = scmp.ne.s32.totalorder %s117, %s133
      %p135 = scmp.eq.s32.totalorder %s25, 0
      %p136 = por %p134, %p135
      %s137 = ssub.s32 %s26, %s38
      %p138 = scmp.eq.s32.totalorder %s137, 0
      %s140 = sadd.s32 %s139, 1
      %s141 = scalar_select %p138, %s139, %s140
      %p144 = pneg %p138
      %p145 = scmp.eq.s32.totalorder %s19, 1
      %p146 = por %p144, %p145
      %p147 = scmp.ne.s32.totalorder %s139, %s142
      %p148 = scmp.eq.s32.totalorder %s19, 0
      %p149 = por %p147, %p148
      %p150 = scmp.ne.s32.totalorder %s139, %s142
      %p151 = scmp.eq.s32.totalorder %s24, 1
      %p152 = por %p150, %p151
      %p153 = scmp.ne.s32.totalorder %s142, %s143
      %p154 = scmp.eq.s32.totalorder %s24, 0
      %p155 = por %p153, %p154
      %p156 = scmp.ne.s32.totalorder %s142, %s143
      %p157 = scmp.eq.s32.totalorder %s25, 1
      %p158 = por %p156, %p157
      %p160 = scmp.ne.s32.totalorder %s143, %s159
      %p161 = scmp.eq.s32.totalorder %s25, 0
      %p162 = por %p160, %p161
      %p163 = scmp.le.s32.totalorder 1, %s19
      %p164 = scmp.lt.s32.totalorder %s19, 3
      %p165 = pnand %p163, %p164
      %p166 = pneg %p165
      // Predicated region
      $region9: #{tpu_custom_call.1} parent=5 // pred_check
        _
      $region10: #{tpu_custom_call.1} parent=5 // pred_check_branch
        %168 = sbr.rel (%p165) target = $region12
      $region11: #{tpu_custom_call.1} parent=5 // pred_region
        %s169 = ssub.s32 %s19, 1
        // Predicated region
        $region13: #{tpu_custom_call.1} parent=11 // pred_check
          %p170 = pneg %p80
        $region14: #{tpu_custom_call.1} parent=11 // pred_check_branch
          %172 = sbr.rel (%p170) target = $region16
        $region15: #{tpu_custom_call.1} parent=11 // pred_region
          %s174 = ssub.s32 6144, 6144
          %175 = vsyncadd [#allocation7], %s174
          %s176 = sshll.u32 [#allocation6], 4
          %s177 = int_to_ptr.vmem [resolvable:$true] %s176
          %182 = dma.hbm_to_vmem [thread:$0]  %s1, 6144, %s177, [#allocation7], 384, 384, 24
        $region16: #{tpu_custom_call.1} parent=11 // pred_fallthru
          _
        // Predicated region
        $region17: #{tpu_custom_call.1} parent=11 // pred_check
          %p183 = pneg %p101
        $region18: #{tpu_custom_call.1} parent=11 // pred_check_branch
          %185 = sbr.rel (%p183) target = $region20
        $region19: #{tpu_custom_call.1} parent=11 // pred_region
          _
        $region20: #{tpu_custom_call.1} parent=11 // pred_fallthru
          _
      $region12: #{tpu_custom_call.1} parent=5 // pred_fallthru
        _
      %p186 = scmp.lt.s32.totalorder %s19, 2
      // Predicated region
      $region21: #{tpu_custom_call.1} parent=5 // pred_check
        %p187 = pneg %p186
      $region22: #{tpu_custom_call.1} parent=5 // pred_check_branch
        %189 = sbr.rel (%p187) target = $region24
      $region23: #{tpu_custom_call.1} parent=5 // pred_region
        // Predicated region
        $region25: #{tpu_custom_call.1} parent=23 // pred_check
          %p190 = pneg %p53
        $region26: #{tpu_custom_call.1} parent=23 // pred_check_branch
          %192 = sbr.rel (%p190) target = $region28
        $region27: #{tpu_custom_call.1} parent=23 // pred_region
          %s193 = sand.u32 %s43, 1
          %s194 = scalar_lea.sflag [#allocation4], %s193
          %s195 = sand.u32 %s43, 1
          %s196 = smul.addr %s195, 96
          %s197 = scalar_lea.vmem [#allocation3], %s196
          %s198 = smul.u32 4, %s27
          %s200 = ssub.s32 1536, 1536
          %201 = vsyncadd %s194, %s200
          %s202 = smul.addr %s26, 3
          %s203 = smul.addr %s198, 3
          %s204 = sadd.s32 %s202, %s203
          %s205 = smul.addr %s204, 128
          %s206 = scalar_lea.hbm %s0, %s205
          %s207 = sshll.u32 %s197, 4
          %s208 = int_to_ptr.vmem [resolvable:$true] %s207
          %213 = dma.hbm_to_vmem [thread:$0]  %s206, 1536, %s208, %s194, 384, 384, 24
        $region28: #{tpu_custom_call.1} parent=23 // pred_fallthru
          _
      $region24: #{tpu_custom_call.1} parent=5 // pred_fallthru
        _
      %p214 = scmp.le.s32.totalorder 1, %s19
      %p215 = scmp.lt.s32.totalorder %s19, 3
      %p216 = pnand %p214, %p215
      %p217 = pneg %p216
      // Predicated region
      $region29: #{tpu_custom_call.1} parent=5 // pred_check
        _
      $region30: #{tpu_custom_call.1} parent=5 // pred_check_branch
        %219 = sbr.rel (%p216) target = $region32
      $region31: #{tpu_custom_call.1} parent=5 // pred_region
        %s220 = ssub.s32 %s19, 1
        %s221 = sand.u32 %s46, 1
        %s222 = scalar_lea.sflag [#allocation4], %s221
        %s223 = sand.u32 %s46, 1
        %s224 = smul.addr %s223, 96
        %s225 = scalar_lea.vmem [#allocation3], %s224
        // Predicated region
        $region33: #{tpu_custom_call.1} parent=31 // pred_check
          %p226 = pneg %p59
        $region34: #{tpu_custom_call.1} parent=31 // pred_check_branch
          %228 = sbr.rel (%p226) target = $region36
        $region35: #{tpu_custom_call.1} parent=31 // pred_region
          %229 = dma.done %s222, 1536
        $region36: #{tpu_custom_call.1} parent=31 // pred_fallthru
          _
        // Predicated region
        $region37: #{tpu_custom_call.1} parent=31 // pred_check
          %p230 = pneg %p80
        $region38: #{tpu_custom_call.1} parent=31 // pred_check_branch
          %232 = sbr.rel (%p230) target = $region40
        $region39: #{tpu_custom_call.1} parent=31 // pred_region
          %233 = dma.done [#allocation7], 6144
        $region40: #{tpu_custom_call.1} parent=31 // pred_fallthru
          _
        %s234 = sand.u32 %s46, 1
        %s235 = scalar_lea.sflag [#allocation4], %s234
        %s236 = sand.u32 %s46, 1
        %s237 = smul.addr %s236, 96
        %s238 = scalar_lea.vmem [#allocation3], %s237
        %p239 = pneg %p59
        %p240 = pneg %p56
        %p241 = pneg %p80
        %p242 = pneg %p77
        %p243 = pneg %p101
        %p244 = pneg %p98
        %p245 = pneg %p129
        %p246 = pneg %p126
        %s247 = sand.u32 %s116, 1
        %s248 = scalar_lea.sflag [#allocation5], %s247
        %s249 = sand.u32 %s116, 1
        %s250 = smul.addr %s249, 32
        %s251 = scalar_lea.vmem [#allocation8], %s250
        %p252 = pneg %p155
        %p253 = pneg %p152
        %s254 = smul.u32 4, %s29
        %s255 = smul.u32 4, %s29
        %p256 = scmp.eq.s32.totalorder %s29, 0
        // Predicated region
        $region41: #{tpu_custom_call.1} parent=31 // pred_check
          %p257 = pneg %p256
        $region42: #{tpu_custom_call.1} parent=31 // pred_check_branch
          %259 = sbr.rel (%p257) target = $region44
        $region43: #{tpu_custom_call.1} parent=31 // pred_region
          %260 = vst [vmem:[#allocation2] sm:$0xff] 0.0
        $region44: #{tpu_custom_call.1} parent=31 // pred_fallthru
          _
        %v261 = vld [vmem:[#allocation6] sm:$0xff]
        %v262 = vld [vmem:[#allocation6 + $0x8] sm:$0xff]
        %v263 = vld [vmem:[#allocation6 + $0x10] sm:$0xff]
        %v264 = vld [vmem:[#allocation6 + $0x18] sm:$0xff]
        %v265 = vld [vmem:[#allocation6 + $0x20] sm:$0xff]
        %v266 = vld [vmem:[#allocation6 + $0x28] sm:$0xff]
        %v267 = vld [vmem:[#allocation6 + $0x30] sm:$0xff]
        %v268 = vld [vmem:[#allocation6 + $0x38] sm:$0xff]
        %v269 = vld [vmem:[#allocation6 + $0x40] sm:$0xff]
        %v270 = vld [vmem:[#allocation6 + $0x48] sm:$0xff]
        %v271 = vld [vmem:[#allocation6 + $0x50] sm:$0xff]
        %v272 = vld [vmem:[#allocation6 + $0x58] sm:$0xff]
        %v273 = vld [vmem:[#allocation6 + $0x60] sm:$0xff]
        %v274 = vld [vmem:[#allocation6 + $0x68] sm:$0xff]
        %v275 = vld [vmem:[#allocation6 + $0x70] sm:$0xff]
        %v276 = vld [vmem:[#allocation6 + $0x78] sm:$0xff]
        %v277 = vld [vmem:[#allocation6 + $0x80] sm:$0xff]
        %v278 = vld [vmem:[#allocation6 + $0x88] sm:$0xff]
        %v279 = vld [vmem:[#allocation6 + $0x90] sm:$0xff]
        %v280 = vld [vmem:[#allocation6 + $0x98] sm:$0xff]
        %v281 = vld [vmem:[#allocation6 + $0xa0] sm:$0xff]
        %v282 = vld [vmem:[#allocation6 + $0xa8] sm:$0xff]
        %v283 = vld [vmem:[#allocation6 + $0xb0] sm:$0xff]
        %v284 = vld [vmem:[#allocation6 + $0xb8] sm:$0xff]
        %v285 = vld [vmem:[#allocation6 + $0xc0] sm:$0xff]
        %v286 = vld [vmem:[#allocation6 + $0xc8] sm:$0xff]
        %v287 = vld [vmem:[#allocation6 + $0xd0] sm:$0xff]
        %v288 = vld [vmem:[#allocation6 + $0xd8] sm:$0xff]
        %v289 = vld [vmem:[#allocation6 + $0xe0] sm:$0xff]
        %v290 = vld [vmem:[#allocation6 + $0xe8] sm:$0xff]
        %v291 = vld [vmem:[#allocation6 + $0xf0] sm:$0xff]
        %v292 = vld [vmem:[#allocation6 + $0xf8] sm:$0xff]
        %v293 = vld [vmem:[#allocation6 + $0x100] sm:$0xff]
        %v294 = vld [vmem:[#allocation6 + $0x108] sm:$0xff]
        %v295 = vld [vmem:[#allocation6 + $0x110] sm:$0xff]
        %v296 = vld [vmem:[#allocation6 + $0x118] sm:$0xff]
        %v297 = vld [vmem:[#allocation6 + $0x120] sm:$0xff]
        %v298 = vld [vmem:[#allocation6 + $0x128] sm:$0xff]
        %v299 = vld [vmem:[#allocation6 + $0x130] sm:$0xff]
        %v300 = vld [vmem:[#allocation6 + $0x138] sm:$0xff]
        %v301 = vld [vmem:[#allocation6 + $0x140] sm:$0xff]
        %v302 = vld [vmem:[#allocation6 + $0x148] sm:$0xff]
        %v303 = vld [vmem:[#allocation6 + $0x150] sm:$0xff]
        %v304 = vld [vmem:[#allocation6 + $0x158] sm:$0xff]
        %v305 = vld [vmem:[#allocation6 + $0x160] sm:$0xff]
        %v306 = vld [vmem:[#allocation6 + $0x168] sm:$0xff]
        %v307 = vld [vmem:[#allocation6 + $0x170] sm:$0xff]
        %v308 = vld [vmem:[#allocation6 + $0x178] sm:$0xff]
        %v309 = vld [vmem:[%s2] sm:$0x1]
        %v311 = vlaneseq
        %v312 = vshrl.u32 %v311, 7
        %v313 = vsub.s32 0, %v312
        %v314 = vrot.slane %v309, %v313
        %v316 = vld [vmem:[#allocation2] sm:$0xff]
        %v317 = vld [vmem:[%s225] sm:$0xff]
        %v318 = vld [vmem:[%s225 + $0x8] sm:$0xff]
        %v319 = vld [vmem:[%s225 + $0x10] sm:$0xff]
        %320 = vmatprep.subr.mxu0 %v262
        %321 = vmatpush1.msra.mxu0 %v261
        %322 = vmatprep.subr.mxu0 %v265
        %323 = vmatpush1.msra.mxu0 %v264
        %324 = vmatprep.subr.mxu0 %v268
        %325 = vmatpush1.msra.mxu0 %v267
        %326 = vmatprep.subr.mxu0 %v271
        %327 = vmatpush1.msra.mxu0 %v270
        %328 = vmatprep.subr.mxu0 %v274
        %329 = vmatpush1.msra.mxu0 %v273
        %330 = vmatprep.subr.mxu0 %v277
        %331 = vmatpush1.msra.mxu0 %v276
        %332 = vmatprep.subr.mxu0 %v280
        %333 = vmatpush1.msra.mxu0 %v279
        %334 = vmatprep.subr.mxu0 %v283
        %335 = vmatpush1.msra.mxu0 %v282
        %336 = vmatprep.subr.mxu0 %v286
        %337 = vmatpush1.msra.mxu0 %v285
        %338 = vmatprep.subr.mxu0 %v289
        %339 = vmatpush1.msra.mxu0 %v288
        %340 = vmatprep.subr.mxu0 %v292
        %341 = vmatpush1.msra.mxu0 %v291
        %342 = vmatprep.subr.mxu0 %v295
        %343 = vmatpush1.msra.mxu0 %v294
        %344 = vmatprep.subr.mxu0 %v298
        %345 = vmatpush1.msra.mxu0 %v297
        %346 = vmatprep.subr.mxu0 %v301
        %347 = vmatpush1.msra.mxu0 %v300
        %348 = vmatprep.subr.mxu0 %v304
        %349 = vmatpush1.msra.mxu0 %v303
        %350 = vmatprep.subr.mxu0 %v307
        %351 = vmatpush1.msra.mxu0 %v306
        %352 = vmatprep.subr.mxu0 0.0
        %353 = vmatpush1.msra.mxu0 0.0
        %354 = vmatprep.subr.mxu0 0.0
        %355 = vmatpush1.msra.mxu0 0.0
        %356 = vmatprep.subr.mxu0 0.0
        %357 = vmatpush1.msra.mxu0 0.0
        %358 = vmatprep.subr.mxu0 0.0
        %359 = vmatpush1.msra.mxu0 0.0
        %360 = vmatprep.subr.mxu0 0.0
        %361 = vmatpush1.msra.mxu0 0.0
        %362 = vmatprep.subr.mxu0 0.0
        %363 = vmatpush1.msra.mxu0 0.0
        %364 = vmatprep.subr.mxu0 0.0
        %365 = vmatpush1.msra.mxu0 0.0
        %366 = vmatprep.subr.mxu0 0.0
        %367 = vmatpush1.msra.mxu0 0.0
        %368 = vmatprep.subr.mxu0 0.0
        %369 = vmatpush1.msra.mxu0 0.0
        %370 = vmatprep.subr.mxu0 0.0
        %371 = vmatpush1.msra.mxu0 0.0
        %372 = vmatprep.subr.mxu0 0.0
        %373 = vmatpush1.msra.mxu0 0.0
        %374 = vmatprep.subr.mxu0 0.0
        %375 = vmatpush1.msra.mxu0 0.0
        %376 = vmatprep.subr.mxu0 0.0
        %377 = vmatpush1.msra.mxu0 0.0
        %378 = vmatprep.subr.mxu0 0.0
        %379 = vmatpush1.msra.mxu0 0.0
        %380 = vmatprep.subr.mxu0 0.0
        %381 = vmatpush1.msra.mxu0 0.0
        %382 = vmatprep.subr.mxu0 0.0
        %383 = vmatpush1.msra.mxu0 0.0
        %384 = vmatprep.mubr.f32.mxu0 0.0
        %385 = vmatmul.mubr.f32.gmra.mrb[0].mxu0 %v316
        %v386 = vpop.f32.mrb[0].mxu0
        %v387 = vadd.f32 0.0, %v386
        %v388 = vpop.f32.mrb[0].mxu0
        %v389 = vadd.f32 0.0, %v388
        %390 = vdwg.mxu0
        %391 = vmatprep.subr.mxu0 0.0
        %392 = vmatpush1.msra.mxu0 %v263
        %393 = vmatprep.subr.mxu0 0.0
        %394 = vmatpush1.msra.mxu0 %v266
        %395 = vmatprep.subr.mxu0 0.0
        %396 = vmatpush1.msra.mxu0 %v269
        %397 = vmatprep.subr.mxu0 0.0
        %398 = vmatpush1.msra.mxu0 %v272
        %399 = vmatprep.subr.mxu0 0.0
        %400 = vmatpush1.msra.mxu0 %v275
        %401 = vmatprep.subr.mxu0 0.0
        %402 = vmatpush1.msra.mxu0 %v278
        %403 = vmatprep.subr.mxu0 0.0
        %404 = vmatpush1.msra.mxu0 %v281
        %405 = vmatprep.subr.mxu0 0.0
        %406 = vmatpush1.msra.mxu0 %v284
        %407 = vmatprep.subr.mxu0 0.0
        %408 = vmatpush1.msra.mxu0 %v287
        %409 = vmatprep.subr.mxu0 0.0
        %410 = vmatpush1.msra.mxu0 %v290
        %411 = vmatprep.subr.mxu0 0.0
        %412 = vmatpush1.msra.mxu0 %v293
        %413 = vmatprep.subr.mxu0 0.0
        %414 = vmatpush1.msra.mxu0 %v296
        %415 = vmatprep.subr.mxu0 0.0
        %416 = vmatpush1.msra.mxu0 %v299
        %417 = vmatprep.subr.mxu0 0.0
        %418 = vmatpush1.msra.mxu0 %v302
        %419 = vmatprep.subr.mxu0 0.0
        %420 = vmatpush1.msra.mxu0 %v305
        %421 = vmatprep.subr.mxu0 0.0
        %422 = vmatpush1.msra.mxu0 %v308
        %423 = vmatprep.subr.mxu0 0.0
        %424 = vmatpush1.msra.mxu0 0.0
        %425 = vmatprep.subr.mxu0 0.0
        %426 = vmatpush1.msra.mxu0 0.0
        %427 = vmatprep.subr.mxu0 0.0
        %428 = vmatpush1.msra.mxu0 0.0
        %429 = vmatprep.subr.mxu0 0.0
        %430 = vmatpush1.msra.mxu0 0.0
        %431 = vmatprep.subr.mxu0 0.0
        %432 = vmatpush1.msra.mxu0 0.0
        %433 = vmatprep.subr.mxu0 0.0
        %434 = vmatpush1.msra.mxu0 0.0
        %435 = vmatprep.subr.mxu0 0.0
        %436 = vmatpush1.msra.mxu0 0.0
        %437 = vmatprep.subr.mxu0 0.0
        %438 = vmatpush1.msra.mxu0 0.0
        %439 = vmatprep.subr.mxu0 0.0
        %440 = vmatpush1.msra.mxu0 0.0
        %441 = vmatprep.subr.mxu0 0.0
        %442 = vmatpush1.msra.mxu0 0.0
        %443 = vmatprep.subr.mxu0 0.0
        %444 = vmatpush1.msra.mxu0 0.0
        %445 = vmatprep.subr.mxu0 0.0
        %446 = vmatpush1.msra.mxu0 0.0
        %447 = vmatprep.subr.mxu0 0.0
        %448 = vmatpush1.msra.mxu0 0.0
        %449 = vmatprep.subr.mxu0 0.0
        %450 = vmatpush1.msra.mxu0 0.0
        %451 = vmatprep.subr.mxu0 0.0
        %452 = vmatpush1.msra.mxu0 0.0
        %453 = vmatprep.subr.mxu0 0.0
        %454 = vmatpush1.msra.mxu0 0.0
        %455 = vmatprep.mubr.f32.mxu0 0.0
        %456 = vmatmul.mubr.f32.gmra.mrb[0].mxu0 %v316
        %v457 = vpop.f32.mrb[0].mxu0
        %v458 = vadd.f32 0.0, %v457
        %v459 = vpop.f32.mrb[0].mxu0
        %460 = vdwg.mxu0
        %v461 = vadd.f32 %v317, %v387
        %v462 = vxor.u32 %v461, 2147483648
        %v463 = vmul.f32 %v462, 1.442695
        %v464 = vpow.pop %v463
        %v465 = vadd.f32 %v464, 1.0
        %v466 = vrcp.pop %v465
        %v467 = vmul.f32 1.0, %v466
        %v468 = vadd.f32 %v318, %v389
        %v469 = vxor.u32 %v468, 2147483648
        %v470 = vmul.f32 %v469, 1.442695
        %v471 = vpow.pop %v470
        %v472 = vadd.f32 %v471, 1.0
        %v473 = vrcp.pop %v472
        %v474 = vmul.f32 1.0, %v473
        %v475 = vadd.f32 %v458, %v314
        %v476 = vmul.f32 %v467, %v475
        %v477 = vadd.f32 %v319, %v476
        %v478 = vtanh.pop %v477
        %v479 = vsub.f32 1.0, %v474
        %v480 = vmul.f32 %v479, %v478
        %v481 = vmul.f32 %v474, %v316
        %v482 = vadd.f32 %v480, %v481
        %483 = vst [vmem:[%s251] sm:$0xff] %v482
        %s484 = scalar_lea.vmem %s225, 24 [#allocation3]
        %v485 = vld [vmem:[%s484] sm:$0xff]
        %v486 = vld [vmem:[%s484 + $0x8] sm:$0xff]
        %v487 = vld [vmem:[%s484 + $0x10] sm:$0xff]
        %488 = vmatprep.subr.mxu0 %v262
        %489 = vmatpush1.msra.mxu0 %v261
        %490 = vmatprep.subr.mxu0 %v265
        %491 = vmatpush1.msra.mxu0 %v264
        %492 = vmatprep.subr.mxu0 %v268
        %493 = vmatpush1.msra.mxu0 %v267
        %494 = vmatprep.subr.mxu0 %v271
        %495 = vmatpush1.msra.mxu0 %v270
        %496 = vmatprep.subr.mxu0 %v274
        %497 = vmatpush1.msra.mxu0 %v273
        %498 = vmatprep.subr.mxu0 %v277
        %499 = vmatpush1.msra.mxu0 %v276
        %500 = vmatprep.subr.mxu0 %v280
        %501 = vmatpush1.msra.mxu0 %v279
        %502 = vmatprep.subr.mxu0 %v283
        %503 = vmatpush1.msra.mxu0 %v282
        %504 = vmatprep.subr.mxu0 %v286
        %505 = vmatpush1.msra.mxu0 %v285
        %506 = vmatprep.subr.mxu0 %v289
        %507 = vmatpush1.msra.mxu0 %v288
        %508 = vmatprep.subr.mxu0 %v292
        %509 = vmatpush1.msra.mxu0 %v291
        %510 = vmatprep.subr.mxu0 %v295
        %511 = vmatpush1.msra.mxu0 %v294
        %512 = vmatprep.subr.mxu0 %v298
        %513 = vmatpush1.msra.mxu0 %v297
        %514 = vmatprep.subr.mxu0 %v301
        %515 = vmatpush1.msra.mxu0 %v300
        %516 = vmatprep.subr.mxu0 %v304
        %517 = vmatpush1.msra.mxu0 %v303
        %518 = vmatprep.subr.mxu0 %v307
        %519 = vmatpush1.msra.mxu0 %v306
        %520 = vmatprep.subr.mxu0 0.0
        %521 = vmatpush1.msra.mxu0 0.0
        %522 = vmatprep.subr.mxu0 0.0
        %523 = vmatpush1.msra.mxu0 0.0
        %524 = vmatprep.subr.mxu0 0.0
        %525 = vmatpush1.msra.mxu0 0.0
        %526 = vmatprep.subr.mxu0 0.0
        %527 = vmatpush1.msra.mxu0 0.0
        %528 = vmatprep.subr.mxu0 0.0
        %529 = vmatpush1.msra.mxu0 0.0
        %530 = vmatprep.subr.mxu0 0.0
        %531 = vmatpush1.msra.mxu0 0.0
        %532 = vmatprep.subr.mxu0 0.0
        %533 = vmatpush1.msra.mxu0 0.0
        %534 = vmatprep.subr.mxu0 0.0
        %535 = vmatpush1.msra.mxu0 0.0
        %536 = vmatprep.subr.mxu0 0.0
        %537 = vmatpush1.msra.mxu0 0.0
        %538 = vmatprep.subr.mxu0 0.0
        %539 = vmatpush1.msra.mxu0 0.0
        %540 = vmatprep.subr.mxu0 0.0
        %541 = vmatpush1.msra.mxu0 0.0
        %542 = vmatprep.subr.mxu0 0.0
        %543 = vmatpush1.msra.mxu0 0.0
        %544 = vmatprep.subr.mxu0 0.0
        %545 = vmatpush1.msra.mxu0 0.0
        %546 = vmatprep.subr.mxu0 0.0
        %547 = vmatpush1.msra.mxu0 0.0
        %548 = vmatprep.subr.mxu0 0.0
        %549 = vmatpush1.msra.mxu0 0.0
        %550 = vmatprep.subr.mxu0 0.0
        %551 = vmatpush1.msra.mxu0 0.0
        %552 = vmatprep.mubr.f32.mxu0 0.0
        %553 = vmatmul.mubr.f32.gmra.mrb[0].mxu0 %v482
        %v554 = vpop.f32.mrb[0].mxu0
        %v555 = vadd.f32 0.0, %v554
        %v556 = vpop.f32.mrb[0].mxu0
        %v557 = vadd.f32 0.0, %v556
        %558 = vdwg.mxu0
        %559 = vmatprep.subr.mxu0 0.0
        %560 = vmatpush1.msra.mxu0 %v263
        %561 = vmatprep.subr.mxu0 0.0
        %562 = vmatpush1.msra.mxu0 %v266
        %563 = vmatprep.subr.mxu0 0.0
        %564 = vmatpush1.msra.mxu0 %v269
        %565 = vmatprep.subr.mxu0 0.0
        %566 = vmatpush1.msra.mxu0 %v272
        %567 = vmatprep.subr.mxu0 0.0
        %568 = vmatpush1.msra.mxu0 %v275
        %569 = vmatprep.subr.mxu0 0.0
        %570 = vmatpush1.msra.mxu0 %v278
        %571 = vmatprep.subr.mxu0 0.0
        %572 = vmatpush1.msra.mxu0 %v281
        %573 = vmatprep.subr.mxu0 0.0
        %574 = vmatpush1.msra.mxu0 %v284
        %575 = vmatprep.subr.mxu0 0.0
        %576 = vmatpush1.msra.mxu0 %v287
        %577 = vmatprep.subr.mxu0 0.0
        %578 = vmatpush1.msra.mxu0 %v290
        %579 = vmatprep.subr.mxu0 0.0
        %580 = vmatpush1.msra.mxu0 %v293
        %581 = vmatprep.subr.mxu0 0.0
        %582 = vmatpush1.msra.mxu0 %v296
        %583 = vmatprep.subr.mxu0 0.0
        %584 = vmatpush1.msra.mxu0 %v299
        %585 = vmatprep.subr.mxu0 0.0
        %586 = vmatpush1.msra.mxu0 %v302
        %587 = vmatprep.subr.mxu0 0.0
        %588 = vmatpush1.msra.mxu0 %v305
        %589 = vmatprep.subr.mxu0 0.0
        %590 = vmatpush1.msra.mxu0 %v308
        %591 = vmatprep.subr.mxu0 0.0
        %592 = vmatpush1.msra.mxu0 0.0
        %593 = vmatprep.subr.mxu0 0.0
        %594 = vmatpush1.msra.mxu0 0.0
        %595 = vmatprep.subr.mxu0 0.0
        %596 = vmatpush1.msra.mxu0 0.0
        %597 = vmatprep.subr.mxu0 0.0
        %598 = vmatpush1.msra.mxu0 0.0
        %599 = vmatprep.subr.mxu0 0.0
        %600 = vmatpush1.msra.mxu0 0.0
        %601 = vmatprep.subr.mxu0 0.0
        %602 = vmatpush1.msra.mxu0 0.0
        %603 = vmatprep.subr.mxu0 0.0
        %604 = vmatpush1.msra.mxu0 0.0
        %605 = vmatprep.subr.mxu0 0.0
        %606 = vmatpush1.msra.mxu0 0.0
        %607 = vmatprep.subr.mxu0 0.0
        %608 = vmatpush1.msra.mxu0 0.0
        %609 = vmatprep.subr.mxu0 0.0
        %610 = vmatpush1.msra.mxu0 0.0
        %611 = vmatprep.subr.mxu0 0.0
        %612 = vmatpush1.msra.mxu0 0.0
        %613 = vmatprep.subr.mxu0 0.0
        %614 = vmatpush1.msra.mxu0 0.0
        %615 = vmatprep.subr.mxu0 0.0
        %616 = vmatpush1.msra.mxu0 0.0
        %617 = vmatprep.subr.mxu0 0.0
        %618 = vmatpush1.msra.mxu0 0.0
        %619 = vmatprep.subr.mxu0 0.0
        %620 = vmatpush1.msra.mxu0 0.0
        %621 = vmatprep.subr.mxu0 0.0
        %622 = vmatpush1.msra.mxu0 0.0
        %623 = vmatprep.mubr.f32.mxu0 0.0
        %624 = vmatmul.mubr.f32.gmra.mrb[0].mxu0 %v482
        %v625 = vpop.f32.mrb[0].mxu0
        %v626 = vadd.f32 0.0, %v625
        %v627 = vpop.f32.mrb[0].mxu0
        %628 = vdwg.mxu0
        %v629 = vadd.f32 %v485, %v555
        %v630 = vxor.u32 %v629, 2147483648
        %v631 = vmul.f32 %v630, 1.442695
        %v632 = vpow.pop %v631
        %v633 = vadd.f32 %v632, 1.0
        %v634 = vrcp.pop %v633
        %v635 = vmul.f32 1.0, %v634
        %v636 = vadd.f32 %v486, %v557
        %v637 = vxor.u32 %v636, 2147483648
        %v638 = vmul.f32 %v637, 1.442695
        %v639 = vpow.pop %v638
        %v640 = vadd.f32 %v639, 1.0
        %v641 = vrcp.pop %v640
        %v642 = vmul.f32 1.0, %v641
        %v643 = vadd.f32 %v626, %v314
        %v644 = vmul.f32 %v635, %v643
        %v645 = vadd.f32 %v487, %v644
        %v646 = vtanh.pop %v645
        %v647 = vsub.f32 1.0, %v642
        %v648 = vmul.f32 %v647, %v646
        %v649 = vmul.f32 %v642, %v482
        %v650 = vadd.f32 %v648, %v649
        %s651 = scalar_lea.vmem %s251, 8 [#allocation8]
        %652 = vst [vmem:[%s651] sm:$0xff] %v650
        %s653 = scalar_lea.vmem %s225, 48 [#allocation3]
        %v654 = vld [vmem:[%s653] sm:$0xff]
        %v655 = vld [vmem:[%s653 + $0x8] sm:$0xff]
        %v656 = vld [vmem:[%s653 + $0x10] sm:$0xff]
        %657 = vmatprep.subr.mxu0 %v262
        %658 = vmatpush1.msra.mxu0 %v261
        %659 = vmatprep.subr.mxu0 %v265
        %660 = vmatpush1.msra.mxu0 %v264
        %661 = vmatprep.subr.mxu0 %v268
        %662 = vmatpush1.msra.mxu0 %v267
        %663 = vmatprep.subr.mxu0 %v271
        %664 = vmatpush1.msra.mxu0 %v270
        %665 = vmatprep.subr.mxu0 %v274
        %666 = vmatpush1.msra.mxu0 %v273
        %667 = vmatprep.subr.mxu0 %v277
        %668 = vmatpush1.msra.mxu0 %v276
        %669 = vmatprep.subr.mxu0 %v280
        %670 = vmatpush1.msra.mxu0 %v279
        %671 = vmatprep.subr.mxu0 %v283
        %672 = vmatpush1.msra.mxu0 %v282
        %673 = vmatprep.subr.mxu0 %v286
        %674 = vmatpush1.msra.mxu0 %v285
        %675 = vmatprep.subr.mxu0 %v289
        %676 = vmatpush1.msra.mxu0 %v288
        %677 = vmatprep.subr.mxu0 %v292
        %678 = vmatpush1.msra.mxu0 %v291
        %679 = vmatprep.subr.mxu0 %v295
        %680 = vmatpush1.msra.mxu0 %v294
        %681 = vmatprep.subr.mxu0 %v298
        %682 = vmatpush1.msra.mxu0 %v297
        %683 = vmatprep.subr.mxu0 %v301
        %684 = vmatpush1.msra.mxu0 %v300
        %685 = vmatprep.subr.mxu0 %v304
        %686 = vmatpush1.msra.mxu0 %v303
        %687 = vmatprep.subr.mxu0 %v307
        %688 = vmatpush1.msra.mxu0 %v306
        %689 = vmatprep.subr.mxu0 0.0
        %690 = vmatpush1.msra.mxu0 0.0
        %691 = vmatprep.subr.mxu0 0.0
        %692 = vmatpush1.msra.mxu0 0.0
        %693 = vmatprep.subr.mxu0 0.0
        %694 = vmatpush1.msra.mxu0 0.0
        %695 = vmatprep.subr.mxu0 0.0
        %696 = vmatpush1.msra.mxu0 0.0
        %697 = vmatprep.subr.mxu0 0.0
        %698 = vmatpush1.msra.mxu0 0.0
        %699 = vmatprep.subr.mxu0 0.0
        %700 = vmatpush1.msra.mxu0 0.0
        %701 = vmatprep.subr.mxu0 0.0
        %702 = vmatpush1.msra.mxu0 0.0
        %703 = vmatprep.subr.mxu0 0.0
        %704 = vmatpush1.msra.mxu0 0.0
        %705 = vmatprep.subr.mxu0 0.0
        %706 = vmatpush1.msra.mxu0 0.0
        %707 = vmatprep.subr.mxu0 0.0
        %708 = vmatpush1.msra.mxu0 0.0
        %709 = vmatprep.subr.mxu0 0.0
        %710 = vmatpush1.msra.mxu0 0.0
        %711 = vmatprep.subr.mxu0 0.0
        %712 = vmatpush1.msra.mxu0 0.0
        %713 = vmatprep.subr.mxu0 0.0
        %714 = vmatpush1.msra.mxu0 0.0
        %715 = vmatprep.subr.mxu0 0.0
        %716 = vmatpush1.msra.mxu0 0.0
        %717 = vmatprep.subr.mxu0 0.0
        %718 = vmatpush1.msra.mxu0 0.0
        %719 = vmatprep.subr.mxu0 0.0
        %720 = vmatpush1.msra.mxu0 0.0
        %721 = vmatprep.mubr.f32.mxu0 0.0
        %722 = vmatmul.mubr.f32.gmra.mrb[0].mxu0 %v650
        %v723 = vpop.f32.mrb[0].mxu0
        %v724 = vadd.f32 0.0, %v723
        %v725 = vpop.f32.mrb[0].mxu0
        %v726 = vadd.f32 0.0, %v725
        %727 = vdwg.mxu0
        %728 = vmatprep.subr.mxu0 0.0
        %729 = vmatpush1.msra.mxu0 %v263
        %730 = vmatprep.subr.mxu0 0.0
        %731 = vmatpush1.msra.mxu0 %v266
        %732 = vmatprep.subr.mxu0 0.0
        %733 = vmatpush1.msra.mxu0 %v269
        %734 = vmatprep.subr.mxu0 0.0
        %735 = vmatpush1.msra.mxu0 %v272
        %736 = vmatprep.subr.mxu0 0.0
        %737 = vmatpush1.msra.mxu0 %v275
        %738 = vmatprep.subr.mxu0 0.0
        %739 = vmatpush1.msra.mxu0 %v278
        %740 = vmatprep.subr.mxu0 0.0
        %741 = vmatpush1.msra.mxu0 %v281
        %742 = vmatprep.subr.mxu0 0.0
        %743 = vmatpush1.msra.mxu0 %v284
        %744 = vmatprep.subr.mxu0 0.0
        %745 = vmatpush1.msra.mxu0 %v287
        %746 = vmatprep.subr.mxu0 0.0
        %747 = vmatpush1.msra.mxu0 %v290
        %748 = vmatprep.subr.mxu0 0.0
        %749 = vmatpush1.msra.mxu0 %v293
        %750 = vmatprep.subr.mxu0 0.0
        %751 = vmatpush1.msra.mxu0 %v296
        %752 = vmatprep.subr.mxu0 0.0
        %753 = vmatpush1.msra.mxu0 %v299
        %754 = vmatprep.subr.mxu0 0.0
        %755 = vmatpush1.msra.mxu0 %v302
        %756 = vmatprep.subr.mxu0 0.0
        %757 = vmatpush1.msra.mxu0 %v305
        %758 = vmatprep.subr.mxu0 0.0
        %759 = vmatpush1.msra.mxu0 %v308
        %760 = vmatprep.subr.mxu0 0.0
        %761 = vmatpush1.msra.mxu0 0.0
        %762 = vmatprep.subr.mxu0 0.0
        %763 = vmatpush1.msra.mxu0 0.0
        %764 = vmatprep.subr.mxu0 0.0
        %765 = vmatpush1.msra.mxu0 0.0
        %766 = vmatprep.subr.mxu0 0.0
        %767 = vmatpush1.msra.mxu0 0.0
        %768 = vmatprep.subr.mxu0 0.0
        %769 = vmatpush1.msra.mxu0 0.0
        %770 = vmatprep.subr.mxu0 0.0
        %771 = vmatpush1.msra.mxu0 0.0
        %772 = vmatprep.subr.mxu0 0.0
        %773 = vmatpush1.msra.mxu0 0.0
        %774 = vmatprep.subr.mxu0 0.0
        %775 = vmatpush1.msra.mxu0 0.0
        %776 = vmatprep.subr.mxu0 0.0
        %777 = vmatpush1.msra.mxu0 0.0
        %778 = vmatprep.subr.mxu0 0.0
        %779 = vmatpush1.msra.mxu0 0.0
        %780 = vmatprep.subr.mxu0 0.0
        %781 = vmatpush1.msra.mxu0 0.0
        %782 = vmatprep.subr.mxu0 0.0
        %783 = vmatpush1.msra.mxu0 0.0
        %784 = vmatprep.subr.mxu0 0.0
        %785 = vmatpush1.msra.mxu0 0.0
        %786 = vmatprep.subr.mxu0 0.0
        %787 = vmatpush1.msra.mxu0 0.0
        %788 = vmatprep.subr.mxu0 0.0
        %789 = vmatpush1.msra.mxu0 0.0
        %790 = vmatprep.subr.mxu0 0.0
        %791 = vmatpush1.msra.mxu0 0.0
        %792 = vmatprep.mubr.f32.mxu0 0.0
        %793 = vmatmul.mubr.f32.gmra.mrb[0].mxu0 %v650
        %v794 = vpop.f32.mrb[0].mxu0
        %v795 = vadd.f32 0.0, %v794
        %v796 = vpop.f32.mrb[0].mxu0
        %797 = vdwg.mxu0
        %v798 = vadd.f32 %v654, %v724
        %v799 = vxor.u32 %v798, 2147483648
        %v800 = vmul.f32 %v799, 1.442695
        %v801 = vpow.pop %v800
        %v802 = vadd.f32 %v801, 1.0
        %v803 = vrcp.pop %v802
        %v804 = vmul.f32 1.0, %v803
        %v805 = vadd.f32 %v655, %v726
        %v806 = vxor.u32 %v805, 2147483648
        %v807 = vmul.f32 %v806, 1.442695
        %v808 = vpow.pop %v807
        %v809 = vadd.f32 %v808, 1.0
        %v810 = vrcp.pop %v809
        %v811 = vmul.f32 1.0, %v810
        %v812 = vadd.f32 %v795, %v314
        %v813 = vmul.f32 %v804, %v812
        %v814 = vadd.f32 %v656, %v813
        %v815 = vtanh.pop %v814
        %v816 = vsub.f32 1.0, %v811
        %v817 = vmul.f32 %v816, %v815
        %v818 = vmul.f32 %v811, %v650
        %v819 = vadd.f32 %v817, %v818
        %s820 = scalar_lea.vmem %s251, 16 [#allocation8]
        %821 = vst [vmem:[%s820] sm:$0xff] %v819
        %s822 = scalar_lea.vmem %s225, 72 [#allocation3]
        %v823 = vld [vmem:[%s822] sm:$0xff]
        %v824 = vld [vmem:[%s822 + $0x8] sm:$0xff]
        %v825 = vld [vmem:[%s822 + $0x10] sm:$0xff]
        %826 = vmatprep.subr.mxu0 %v262
        %827 = vmatpush1.msra.mxu0 %v261
        %828 = vmatprep.subr.mxu0 %v265
        %829 = vmatpush1.msra.mxu0 %v264
        %830 = vmatprep.subr.mxu0 %v268
        %831 = vmatpush1.msra.mxu0 %v267
        %832 = vmatprep.subr.mxu0 %v271
        %833 = vmatpush1.msra.mxu0 %v270
        %834 = vmatprep.subr.mxu0 %v274
        %835 = vmatpush1.msra.mxu0 %v273
        %836 = vmatprep.subr.mxu0 %v277
        %837 = vmatpush1.msra.mxu0 %v276
        %838 = vmatprep.subr.mxu0 %v280
        %839 = vmatpush1.msra.mxu0 %v279
        %840 = vmatprep.subr.mxu0 %v283
        %841 = vmatpush1.msra.mxu0 %v282
        %842 = vmatprep.subr.mxu0 %v286
        %843 = vmatpush1.msra.mxu0 %v285
        %844 = vmatprep.subr.mxu0 %v289
        %845 = vmatpush1.msra.mxu0 %v288
        %846 = vmatprep.subr.mxu0 %v292
        %847 = vmatpush1.msra.mxu0 %v291
        %848 = vmatprep.subr.mxu0 %v295
        %849 = vmatpush1.msra.mxu0 %v294
        %850 = vmatprep.subr.mxu0 %v298
        %851 = vmatpush1.msra.mxu0 %v297
        %852 = vmatprep.subr.mxu0 %v301
        %853 = vmatpush1.msra.mxu0 %v300
        %854 = vmatprep.subr.mxu0 %v304
        %855 = vmatpush1.msra.mxu0 %v303
        %856 = vmatprep.subr.mxu0 %v307
        %857 = vmatpush1.msra.mxu0 %v306
        %858 = vmatprep.subr.mxu0 0.0
        %859 = vmatpush1.msra.mxu0 0.0
        %860 = vmatprep.subr.mxu0 0.0
        %861 = vmatpush1.msra.mxu0 0.0
        %862 = vmatprep.subr.mxu0 0.0
        %863 = vmatpush1.msra.mxu0 0.0
        %864 = vmatprep.subr.mxu0 0.0
        %865 = vmatpush1.msra.mxu0 0.0
        %866 = vmatprep.subr.mxu0 0.0
        %867 = vmatpush1.msra.mxu0 0.0
        %868 = vmatprep.subr.mxu0 0.0
        %869 = vmatpush1.msra.mxu0 0.0
        %870 = vmatprep.subr.mxu0 0.0
        %871 = vmatpush1.msra.mxu0 0.0
        %872 = vmatprep.subr.mxu0 0.0
        %873 = vmatpush1.msra.mxu0 0.0
        %874 = vmatprep.subr.mxu0 0.0
        %875 = vmatpush1.msra.mxu0 0.0
        %876 = vmatprep.subr.mxu0 0.0
        %877 = vmatpush1.msra.mxu0 0.0
        %878 = vmatprep.subr.mxu0 0.0
        %879 = vmatpush1.msra.mxu0 0.0
        %880 = vmatprep.subr.mxu0 0.0
        %881 = vmatpush1.msra.mxu0 0.0
        %882 = vmatprep.subr.mxu0 0.0
        %883 = vmatpush1.msra.mxu0 0.0
        %884 = vmatprep.subr.mxu0 0.0
        %885 = vmatpush1.msra.mxu0 0.0
        %886 = vmatprep.subr.mxu0 0.0
        %887 = vmatpush1.msra.mxu0 0.0
        %888 = vmatprep.subr.mxu0 0.0
        %889 = vmatpush1.msra.mxu0 0.0
        %890 = vmatprep.mubr.f32.mxu0 0.0
        %891 = vmatmul.mubr.f32.gmra.mrb[0].mxu0 %v819
        %v892 = vpop.f32.mrb[0].mxu0
        %v893 = vadd.f32 0.0, %v892
        %v894 = vpop.f32.mrb[0].mxu0
        %v895 = vadd.f32 0.0, %v894
        %896 = vdwg.mxu0
        %897 = vmatprep.subr.mxu0 0.0
        %898 = vmatpush1.msra.mxu0 %v263
        %899 = vmatprep.subr.mxu0 0.0
        %900 = vmatpush1.msra.mxu0 %v266
        %901 = vmatprep.subr.mxu0 0.0
        %902 = vmatpush1.msra.mxu0 %v269
        %903 = vmatprep.subr.mxu0 0.0
        %904 = vmatpush1.msra.mxu0 %v272
        %905 = vmatprep.subr.mxu0 0.0
        %906 = vmatpush1.msra.mxu0 %v275
        %907 = vmatprep.subr.mxu0 0.0
        %908 = vmatpush1.msra.mxu0 %v278
        %909 = vmatprep.subr.mxu0 0.0
        %910 = vmatpush1.msra.mxu0 %v281
        %911 = vmatprep.subr.mxu0 0.0
        %912 = vmatpush1.msra.mxu0 %v284
        %913 = vmatprep.subr.mxu0 0.0
        %914 = vmatpush1.msra.mxu0 %v287
        %915 = vmatprep.subr.mxu0 0.0
        %916 = vmatpush1.msra.mxu0 %v290
        %917 = vmatprep.subr.mxu0 0.0
        %918 = vmatpush1.msra.mxu0 %v293
        %919 = vmatprep.subr.mxu0 0.0
        %920 = vmatpush1.msra.mxu0 %v296
        %921 = vmatprep.subr.mxu0 0.0
        %922 = vmatpush1.msra.mxu0 %v299
        %923 = vmatprep.subr.mxu0 0.0
        %924 = vmatpush1.msra.mxu0 %v302
        %925 = vmatprep.subr.mxu0 0.0
        %926 = vmatpush1.msra.mxu0 %v305
        %927 = vmatprep.subr.mxu0 0.0
        %928 = vmatpush1.msra.mxu0 %v308
        %929 = vmatprep.subr.mxu0 0.0
        %930 = vmatpush1.msra.mxu0 0.0
        %931 = vmatprep.subr.mxu0 0.0
        %932 = vmatpush1.msra.mxu0 0.0
        %933 = vmatprep.subr.mxu0 0.0
        %934 = vmatpush1.msra.mxu0 0.0
        %935 = vmatprep.subr.mxu0 0.0
        %936 = vmatpush1.msra.mxu0 0.0
        %937 = vmatprep.subr.mxu0 0.0
        %938 = vmatpush1.msra.mxu0 0.0
        %939 = vmatprep.subr.mxu0 0.0
        %940 = vmatpush1.msra.mxu0 0.0
        %941 = vmatprep.subr.mxu0 0.0
        %942 = vmatpush1.msra.mxu0 0.0
        %943 = vmatprep.subr.mxu0 0.0
        %944 = vmatpush1.msra.mxu0 0.0
        %945 = vmatprep.subr.mxu0 0.0
        %946 = vmatpush1.msra.mxu0 0.0
        %947 = vmatprep.subr.mxu0 0.0
        %948 = vmatpush1.msra.mxu0 0.0
        %949 = vmatprep.subr.mxu0 0.0
        %950 = vmatpush1.msra.mxu0 0.0
        %951 = vmatprep.subr.mxu0 0.0
        %952 = vmatpush1.msra.mxu0 0.0
        %953 = vmatprep.subr.mxu0 0.0
        %954 = vmatpush1.msra.mxu0 0.0
        %955 = vmatprep.subr.mxu0 0.0
        %956 = vmatpush1.msra.mxu0 0.0
        %957 = vmatprep.subr.mxu0 0.0
        %958 = vmatpush1.msra.mxu0 0.0
        %959 = vmatprep.subr.mxu0 0.0
        %960 = vmatpush1.msra.mxu0 0.0
        %961 = vmatprep.mubr.f32.mxu0 0.0
        %962 = vmatmul.mubr.f32.gmra.mrb[0].mxu0 %v819
        %v963 = vpop.f32.mrb[0].mxu0
        %v964 = vadd.f32 0.0, %v963
        %v965 = vpop.f32.mrb[0].mxu0
        %966 = vdwg.mxu0
        %v967 = vadd.f32 %v823, %v893
        %v968 = vxor.u32 %v967, 2147483648
        %v969 = vmul.f32 %v968, 1.442695
        %v970 = vpow.pop %v969
        %v971 = vadd.f32 %v970, 1.0
        %v972 = vrcp.pop %v971
        %v973 = vmul.f32 1.0, %v972
        %v974 = vadd.f32 %v824, %v895
        %v975 = vxor.u32 %v974, 2147483648
        %v976 = vmul.f32 %v975, 1.442695
        %v977 = vpow.pop %v976
        %v978 = vadd.f32 %v977, 1.0
        %v979 = vrcp.pop %v978
        %v980 = vmul.f32 1.0, %v979
        %v981 = vadd.f32 %v964, %v314
        %v982 = vmul.f32 %v973, %v981
        %v983 = vadd.f32 %v825, %v982
        %v984 = vtanh.pop %v983
        %v985 = vsub.f32 1.0, %v980
        %v986 = vmul.f32 %v985, %v984
        %v987 = vmul.f32 %v980, %v819
        %v988 = vadd.f32 %v986, %v987
        %s989 = scalar_lea.vmem %s251, 24 [#allocation8]
        %990 = vst [vmem:[%s989] sm:$0xff] %v988
        %991 = vst [vmem:[#allocation2] sm:$0xff] %v988
        %p992 = scmp.eq.s32.totalorder %s29, 1
        // Predicated region
        $region45: #{tpu_custom_call.1} parent=31 // pred_check
          %p993 = pneg %p992
        $region46: #{tpu_custom_call.1} parent=31 // pred_check_branch
          %995 = sbr.rel (%p993) target = $region48
        $region47: #{tpu_custom_call.1} parent=31 // pred_region
          %996 = vst [vmem:[#allocation9] sm:$0xff] %v988
        $region48: #{tpu_custom_call.1} parent=31 // pred_fallthru
          _
        %s997 = sand.u32 %s116, 1
        %s998 = scalar_lea.sflag [#allocation5], %s997
        %s999 = sand.u32 %s116, 1
        %s1000 = smul.addr %s999, 32
        %s1001 = scalar_lea.vmem [#allocation8], %s1000
        // Predicated region
        $region49: #{tpu_custom_call.1} parent=31 // pred_check
          %p1002 = pneg %p126
        $region50: #{tpu_custom_call.1} parent=31 // pred_check_branch
          %1004 = sbr.rel (%p1002) target = $region52
        $region51: #{tpu_custom_call.1} parent=31 // pred_region
          %s1005 = smul.u32 4, %s29
          %s1007 = ssub.s32 512, 512
          %1008 = vsyncadd %s998, %s1007
          %s1009 = sadd.s32 %s28, %s1005
          %s1010 = smul.addr %s1009, 128
          %s1011 = scalar_lea.hbm %s3, %s1010
          %s1012 = sshll.u32 %s1001, 4
          %s1013 = int_to_ptr.vmem [resolvable:$true] %s1012
          %1018 = dma.vmem_to_hbm [thread:$0]  %s1013, 512, %s1011, %s998, 128, 128, 8
        $region52: #{tpu_custom_call.1} parent=31 // pred_fallthru
          _
        // Predicated region
        $region53: #{tpu_custom_call.1} parent=31 // pred_check
          %p1019 = pneg %p152
        $region54: #{tpu_custom_call.1} parent=31 // pred_check_branch
          %1021 = sbr.rel (%p1019) target = $region56
        $region55: #{tpu_custom_call.1} parent=31 // pred_region
          %s1023 = ssub.s32 128, 128
          %1024 = vsyncadd [#allocation10], %s1023
          %s1025 = smul.addr %s28, 128
          %s1026 = scalar_lea.hbm %s4, %s1025
          %s1028 = sshll.u32 [#allocation9], 4
          %s1029 = int_to_ptr.vmem [resolvable:$true] %s1028
          %1031 = dma.vmem_to_hbm [thread:$0]  %s1029, 128, %s1026, [#allocation10]
        $region56: #{tpu_custom_call.1} parent=31 // pred_fallthru
          _
        // Predicated region
        $region57: #{tpu_custom_call.1} parent=31 // pred_check
          %p1032 = pneg %p152
        $region58: #{tpu_custom_call.1} parent=31 // pred_check_branch
          %1034 = sbr.rel (%p1032) target = $region60
        $region59: #{tpu_custom_call.1} parent=31 // pred_region
          %1035 = dma.done [#allocation10], 128
        $region60: #{tpu_custom_call.1} parent=31 // pred_fallthru
          _
      $region32: #{tpu_custom_call.1} parent=5 // pred_fallthru
        _
      %p1036 = scmp.le.s32.totalorder 2, %s19
      // Predicated region
      $region61: #{tpu_custom_call.1} parent=5 // pred_check
        %p1037 = pneg %p1036
      $region62: #{tpu_custom_call.1} parent=5 // pred_check_branch
        %1039 = sbr.rel (%p1037) target = $region64
      $region63: #{tpu_custom_call.1} parent=5 // pred_region
        %s1040 = ssub.s32 %s19, 2
        // Predicated region
        $region65: #{tpu_custom_call.1} parent=63 // pred_check
          %p1041 = pneg %p132
        $region66: #{tpu_custom_call.1} parent=63 // pred_check_branch
          %1043 = sbr.rel (%p1041) target = $region68
        $region67: #{tpu_custom_call.1} parent=63 // pred_region
          %s1044 = sand.u32 %s117, 1
          %s1045 = scalar_lea.sflag [#allocation5], %s1044
          %s1046 = sand.u32 %s117, 1
          %s1047 = smul.addr %s1046, 32
          %s1048 = scalar_lea.vmem [#allocation8], %s1047
          %1049 = dma.done %s1045, 512
        $region68: #{tpu_custom_call.1} parent=63 // pred_fallthru
          _
      $region64: #{tpu_custom_call.1} parent=5 // pred_fallthru
        _
    $region6: #{tpu_custom_call.1} parent=1 // loop_footer
      %s23 = sadd.s32 1, %s19
    $region7: #{tpu_custom_call.1} parent=1 // loop_footer_branch
      %18 = sbr.rel target = $region3
    $region8: #{tpu_custom_call.1} parent=1 // loop_exit
      _
    %1050 = vsyncpa [#allocation4], 1
    %s1051 = scalar_lea.sflag [#allocation4], 1
    %1052 = vsyncpa %s1051, 1
    %1053 = vsyncpa [#allocation7], 1
    %1054 = vsyncpa [#allocation5], 1
    %s1055 = scalar_lea.sflag [#allocation5], 1
    %1056 = vsyncpa %s1055, 1
    %1057 = vsyncpa [#allocation10], 1

</llo_original>
